<compile_context>
chip_gen: v6e
topology: v6e:2x2x1
jax: 0.10.0
libtpu: 0.0.40
codegen_flags: <defaults>
</compile_context>

<pallas_src>
import numpy as np
import jax
import jax.numpy as jnp
from jax.experimental import pallas as pl
from jax.experimental.pallas import tpu as pltpu


# ----------------------------- configuration -------------------------------
class Cfg:
    in_channels = 3
    temporal_patch_size = 2
    patch_size = 4
    spatial_patch_size = 4
    spatial_merge_size = 2
    hidden_size = 128          # lane-dense (multiple of 128) outputs
    num_heads = 4              # head_dim = 32
    intermediate_size = 256
    depth = 2
    window_size = 16           # -> vit_merger_window_size = 16 // 2 // 4 = 2
    out_hidden_size = 128
    fullatt_block_indexes = [0]
    hidden_act = "silu"


_EPS = 1e-6
_ROW_TILE = 128                       # production: 256-512 (v6e/v5e), 128-256 (v7x)
_VMEM_LIMIT = 48 * 1024 * 1024        # safe on all chips; raise on v6e/v5e


def _params(sem):
    return pltpu.CompilerParams(dimension_semantics=sem,
                                vmem_limit_bytes=_VMEM_LIMIT)


def _merge_tile(m):
    for t in (128, 64, 32, 16, 8):
        if m % t == 0:
            return t
    return m


# ------------------------------ Pallas kernels ------------------------------
def pallas_patch_embed(x, w, tile):
    """x:(S_pad, C*T*P*P) bf16 @ w:(C*T*P*P, D) bf16 -> (S_pad, D) f32."""
    S_pad, In = x.shape
    D = w.shape[1]

    def kernel(x_ref, w_ref, o_ref):
        o_ref[...] = jnp.dot(x_ref[...], w_ref[...],
                             preferred_element_type=jnp.float32)

    return pl.pallas_call(
        kernel,
        out_shape=jax.ShapeDtypeStruct((S_pad, D), jnp.float32),
        grid=(S_pad // tile,),
        in_specs=[pl.BlockSpec((tile, In), lambda i: (i, 0)),
                  pl.BlockSpec((In, D), lambda i: (0, 0))],
        out_specs=pl.BlockSpec((tile, D), lambda i: (i, 0)),
        compiler_params=_params(("parallel",)),
    )(x, w)


def pallas_qkv_rope(hidden, norm_w, w_qkv, b_qkv, cos_half, sin_half, tile):
    """Fused RMSNorm -> QKV matmul (+bias) -> slab-wide RoPE.

    w_qkv/b_qkv columns are pre-permuted so q and k are laid out as
    [all heads' x1 halves | all heads' x2 halves]; cos_half/sin_half are
    (S_pad, D//2) (tiled per head on the host).  Outputs: q (S_pad, D) bf16
    and kv (S_pad, 2D) bf16 where kv = [k (permuted) | v (original layout)].
    """
    S_pad, D = hidden.shape
    threeD = w_qkv.shape[1]
    halfD = D // 2

    def kernel(h_ref, nw_ref, w_ref, b_ref, cos_ref, sin_ref, q_ref, kv_ref):
        x = h_ref[...]
        var = jnp.mean(x * x, axis=-1, keepdims=True)
        xn = (x * jax.lax.rsqrt(var + _EPS) * nw_ref[...]).astype(jnp.bfloat16)
        qkv = jnp.dot(xn, w_ref[...],
                      preferred_element_type=jnp.float32) + b_ref[...]
        c = cos_ref[...]
        s = sin_ref[...]
        q1 = qkv[:, :halfD]
        q2 = qkv[:, halfD:D]
        k1 = qkv[:, D:D + halfD]
        k2 = qkv[:, D + halfD:2 * D]
        v = qkv[:, 2 * D:]
        # out = x*cos + rotate_half(x)*sin, rotate_half = [-x2, x1]
        q_ref[...] = jnp.concatenate(
            [q1 * c - q2 * s, q2 * c + q1 * s], axis=-1).astype(jnp.bfloat16)
        kv_ref[...] = jnp.concatenate(
            [k1 * c - k2 * s, k2 * c + k1 * s, v], axis=-1).astype(jnp.bfloat16)

    return pl.pallas_call(
        kernel,
        out_shape=(jax.ShapeDtypeStruct((S_pad, D), jnp.bfloat16),
                   jax.ShapeDtypeStruct((S_pad, 2 * D), jnp.bfloat16)),
        grid=(S_pad // tile,),
        in_specs=[pl.BlockSpec((tile, D), lambda i: (i, 0)),
                  pl.BlockSpec((1, D), lambda i: (0, 0)),
                  pl.BlockSpec((D, threeD), lambda i: (0, 0)),
                  pl.BlockSpec((1, threeD), lambda i: (0, 0)),
                  pl.BlockSpec((tile, halfD), lambda i: (i, 0)),
                  pl.BlockSpec((tile, halfD), lambda i: (i, 0))],
        out_specs=(pl.BlockSpec((tile, D), lambda i: (i, 0)),
                   pl.BlockSpec((tile, 2 * D), lambda i: (i, 0))),
        compiler_params=_params(("parallel",)),
    )(hidden, norm_w, w_qkv, b_qkv, cos_half, sin_half)


def pallas_flash_attn_proj(q, kv, hidden, seg_q, seg_k, w_proj, b_proj,
                           kv_start, kv_count, max_kv_tiles, num_heads,
                           tile_q, tile_k):
    """Flash-style segmented attention + output projection + residual.

    grid = (num_q_tiles "parallel", max_kv_tiles "arbitrary").  Online-softmax
    m/l per head and a (TQ, D) accumulator live in VMEM scratch.  The scalar-
    prefetched per-q-tile (kv_tile_start, kv_tile_count) arrays make the KV
    axis block-diagonal for the windowed layers (out-of-range steps are
    skipped with pl.when and re-use the last valid KV block -> no extra DMA).
    """
    S_pad, D = hidden.shape
    H = num_heads
    Dh = D // H
    hd2 = Dh // 2
    halfD = D // 2
    scale = 1.0 / float(np.sqrt(Dh))
    nq = S_pad // tile_q

    def kv_idx(i, j, start_ref, count_ref):
        return (start_ref[i] + jnp.minimum(j, count_ref[i] - 1), 0)

    def segk_idx(i, j, start_ref, count_ref):
        return (0, start_ref[i] + jnp.minimum(j, count_ref[i] - 1))

    def kernel(start_ref, count_ref, q_ref, kv_ref, h_ref, sq_ref, sk_ref,
               w_ref, b_ref, o_ref, m_sc, l_sc, acc_sc):
        i = pl.program_id(0)
        j = pl.program_id(1)

        @pl.when(j == 0)
        def _init():
            m_sc[...] = jnp.full_like(m_sc, -jnp.inf)
            l_sc[...] = jnp.zeros_like(l_sc)
            acc_sc[...] = jnp.zeros_like(acc_sc)

        @pl.when(j < count_ref[i])
        def _update():
            mask = sq_ref[...] == sk_ref[...]          # (TQ,1)==(1,TK) -> (TQ,TK)
            qt = q_ref[...]                            # (TQ, D) bf16, permuted
            kt = kv_ref[:, :D]                         # (TK, D) bf16, permuted
            for h in range(H):
                q1 = qt[:, h * hd2:(h + 1) * hd2]
                q2 = qt[:, halfD + h * hd2: halfD + (h + 1) * hd2]
                k1 = kt[:, h * hd2:(h + 1) * hd2]
                k2 = kt[:, halfD + h * hd2: halfD + (h + 1) * hd2]
                s = (jax.lax.dot_general(q1, k1, (((1,), (1,)), ((), ())),
                                         preferred_element_type=jnp.float32) +
                     jax.lax.dot_general(q2, k2, (((1,), (1,)), ((), ())),
                                         preferred_element_type=jnp.float32)
                     ) * scale
                s = jnp.where(mask, s, jnp.float32(-1e30))   # f32 masked scores
                m_prev = m_sc[h]
                m_new = jnp.maximum(m_prev, jnp.max(s, axis=-1, keepdims=True))
                alpha = jnp.exp(m_prev - m_new)
                p = jnp.exp(s - m_new)
                l_sc[h] = alpha * l_sc[h] + jnp.sum(p, axis=-1, keepdims=True)
                m_sc[h] = m_new
                v_h = kv_ref[:, D + h * Dh: D + (h + 1) * Dh]  # original layout
                pv = jnp.dot(p.astype(jnp.bfloat16), v_h,
                             preferred_element_type=jnp.float32)
                acc_sc[:, h * Dh:(h + 1) * Dh] = (
                    alpha * acc_sc[:, h * Dh:(h + 1) * Dh] + pv)

        @pl.when(j == pl.num_programs(1) - 1)
        def _finalize():
            for h in range(H):
                acc_sc[:, h * Dh:(h + 1) * Dh] = (
                    acc_sc[:, h * Dh:(h + 1) * Dh]
                    * pl.reciprocal(l_sc[h], approx=True))
            proj = jnp.dot(acc_sc[...].astype(jnp.bfloat16), w_ref[...],
                           preferred_element_type=jnp.float32) + b_ref[...]
            o_ref[...] = h_ref[...] + proj            # fused residual

    grid_spec = pltpu.PrefetchScalarGridSpec(
        num_scalar_prefetch=2,
        grid=(nq, max_kv_tiles),
        in_specs=[
            pl.BlockSpec((tile_q, D), lambda i, j, s, c: (i, 0)),     # q tile
            pl.BlockSpec((tile_k, 2 * D), kv_idx),                    # kv tile
            pl.BlockSpec((tile_q, D), lambda i, j, s, c: (i, 0)),     # residual
            pl.BlockSpec((tile_q, 1), lambda i, j, s, c: (i, 0)),     # seg (q)
            pl.BlockSpec((1, tile_k), segk_idx),                      # seg (k)
            pl.BlockSpec((D, D), lambda i, j, s, c: (0, 0)),          # proj w
            pl.BlockSpec((1, D), lambda i, j, s, c: (0, 0)),          # proj b
        ],
        out_specs=pl.BlockSpec((tile_q, D), lambda i, j, s, c: (i, 0)),
        scratch_shapes=[pltpu.VMEM((H, tile_q, 1), jnp.float32),      # m
                        pltpu.VMEM((H, tile_q, 1), jnp.float32),      # l
                        pltpu.VMEM((tile_q, D), jnp.float32)],        # acc
    )
    return pl.pallas_call(
        kernel,
        out_shape=jax.ShapeDtypeStruct((S_pad, D), jnp.float32),
        grid_spec=grid_spec,
        compiler_params=_params(("parallel", "arbitrary")),
    )(kv_start, kv_count, q, kv, hidden, seg_q, seg_k, w_proj, b_proj)


def pallas_mlp_block(hidden, norm_w, w_gate, b_gate, w_up, b_up,
                     w_down, b_down, tile):
    """Fused RMSNorm -> gate/up matmuls -> SiLU*up -> down matmul -> residual."""
    S_pad, D = hidden.shape
    I = w_gate.shape[1]

    def kernel(h_ref, nw_ref, wg_ref, bg_ref, wu_ref, bu_ref, wd_ref, bd_ref,
               o_ref):
        x = h_ref[...]
        var = jnp.mean(x * x, axis=-1, keepdims=True)
        xn = (x * jax.lax.rsqrt(var + _EPS) * nw_ref[...]).astype(jnp.bfloat16)
        g = jnp.dot(xn, wg_ref[...], preferred_element_type=jnp.float32) + bg_ref[...]
        u = jnp.dot(xn, wu_ref[...], preferred_element_type=jnp.float32) + bu_ref[...]
        a = (jax.nn.silu(g) * u).astype(jnp.bfloat16)          # f32 SiLU math
        d = jnp.dot(a, wd_ref[...], preferred_element_type=jnp.float32) + bd_ref[...]
        o_ref[...] = x + d                                     # fused residual

    return pl.pallas_call(
        kernel,
        out_shape=jax.ShapeDtypeStruct((S_pad, D), jnp.float32),
        grid=(S_pad // tile,),
        in_specs=[pl.BlockSpec((tile, D), lambda i: (i, 0)),
                  pl.BlockSpec((1, D), lambda i: (0, 0)),
                  pl.BlockSpec((D, I), lambda i: (0, 0)),
                  pl.BlockSpec((1, I), lambda i: (0, 0)),
                  pl.BlockSpec((D, I), lambda i: (0, 0)),
                  pl.BlockSpec((1, I), lambda i: (0, 0)),
                  pl.BlockSpec((I, D), lambda i: (0, 0)),
                  pl.BlockSpec((1, D), lambda i: (0, 0))],
        out_specs=pl.BlockSpec((tile, D), lambda i: (i, 0)),
        compiler_params=_params(("parallel",)),
    )(hidden, norm_w, w_gate, b_gate, w_up, b_up, w_down, b_down)


def pallas_merger(hidden_merged, ln_w, w1, b1, w2, b2, hidden_size):
    """Fused patch merger: per-token RMSNorm (ln_q) -> fc1 -> GELU -> fc2."""
    M_pad, MD = hidden_merged.shape
    D = hidden_size
    smu = MD // D
    Mid = w1.shape[1]
    O = w2.shape[1]
    TM = _merge_tile(M_pad)

    def kernel(x_ref, ln_ref, w1_ref, b1_ref, w2_ref, b2_ref, o_ref):
        x = x_ref[...]
        parts = []
        for c in range(smu):              # RMSNorm per original token (D cols)
            xc = x[:, c * D:(c + 1) * D]
            var = jnp.mean(xc * xc, axis=-1, keepdims=True)
            parts.append(xc * jax.lax.rsqrt(var + _EPS) * ln_ref[...])
        xn = jnp.concatenate(parts, axis=-1).astype(jnp.bfloat16)
        h = jnp.dot(xn, w1_ref[...], preferred_element_type=jnp.float32) + b1_ref[...]
        h = jax.nn.gelu(h, approximate=False)                  # F.gelu (erf)
        o_ref[...] = jnp.dot(h.astype(jnp.bfloat16), w2_ref[...],
                             preferred_element_type=jnp.float32) + b2_ref[...]

    return pl.pallas_call(
        kernel,
        out_shape=jax.ShapeDtypeStruct((M_pad, O), jnp.float32),
        grid=(M_pad // TM,),
        in_specs=[pl.BlockSpec((TM, MD), lambda i: (i, 0)),
                  pl.BlockSpec((1, D), lambda i: (0, 0)),
                  pl.BlockSpec((MD, Mid), lambda i: (0, 0)),
                  pl.BlockSpec((1, Mid), lambda i: (0, 0)),
                  pl.BlockSpec((Mid, O), lambda i: (0, 0)),
                  pl.BlockSpec((1, O), lambda i: (0, 0))],
        out_specs=pl.BlockSpec((TM, O), lambda i: (i, 0)),
        compiler_params=_params(("parallel",)),
    )(hidden_merged, ln_w, w1, b1, w2, b2)


# --------------------------- host-side index glue ---------------------------
def get_window_index(grid_thw, cfg):
    window_index = []
    cu_window_seqlens = [0]
    window_index_id = 0
    smu = cfg.spatial_merge_size ** 2
    vws = cfg.window_size // cfg.spatial_merge_size // cfg.patch_size
    for grid_t, grid_h, grid_w in grid_thw:
        llm_h = grid_h // cfg.spatial_merge_size
        llm_w = grid_w // cfg.spatial_merge_size
        index = np.arange(grid_t * llm_h * llm_w).reshape(grid_t, llm_h, llm_w)
        pad_h = vws - llm_h % vws
        pad_w = vws - llm_w % vws
        nwh = (llm_h + pad_h) // vws
        nww = (llm_w + pad_w) // vws
        index_padded = np.pad(index, ((0, 0), (0, pad_h), (0, pad_w)),
                              constant_values=-100)
        index_padded = index_padded.reshape(grid_t, nwh, vws, nww, vws)
        index_padded = index_padded.transpose(0, 1, 3, 2, 4).reshape(
            grid_t, nwh * nww, vws, vws)
        seqlens = (index_padded != -100).sum(axis=(2, 3)).reshape(-1)
        index_padded = index_padded.reshape(-1)
        index_new = index_padded[index_padded != -100]
        window_index.append(index_new + window_index_id)
        cu_tmp = np.cumsum(seqlens) * smu + cu_window_seqlens[-1]
        cu_window_seqlens.extend([int(v) for v in cu_tmp])
        window_index_id += int(grid_t * llm_h * llm_w)
    return np.concatenate(window_index, axis=0), cu_window_seqlens


def unique_consecutive(arr):
    arr = np.asarray(arr)
    keep = np.concatenate(([True], np.diff(arr) != 0))
    return arr[keep]


def seg_ids_from_cu(cu, S):
    cu = np.asarray(cu, dtype=np.int64)
    return np.searchsorted(cu[1:], np.arange(S), side="right").astype(np.int32)


def build_rotary(grid_thw, cfg, S):
    """(S, head_dim//2) rotary angles in the original (pre-window) order."""
    sms = cfg.spatial_merge_size
    Dh = cfg.hidden_size // cfg.num_heads
    pos_ids = []
    for t, h, w_ in grid_thw:
        hpos = np.arange(h)[:, None].repeat(w_, axis=1)
        hpos = hpos.reshape(h // sms, sms, w_ // sms, sms
                            ).transpose(0, 2, 1, 3).reshape(-1)
        wpos = np.arange(w_)[None, :].repeat(h, axis=0)
        wpos = wpos.reshape(h // sms, sms, w_ // sms, sms
                            ).transpose(0, 2, 1, 3).reshape(-1)
        pos_ids.append(np.tile(np.stack([hpos, wpos], axis=-1), (t, 1)))
    pos_ids = np.concatenate(pos_ids, axis=0)                 # (S, 2)
    dim = Dh // 2
    inv_freq = 1.0 / (10000.0 ** (np.arange(0, dim, 2, dtype=np.float32) / dim))
    max_grid = max(max(h, w_) for _, h, w_ in grid_thw)
    seq = np.arange(max_grid, dtype=np.float32)
    rotary_full = np.outer(seq, inv_freq)                     # (G, Dh//4)
    return rotary_full[pos_ids].reshape(S, -1)                # (S, Dh//2)


def full_cu_seqlens(grid_thw):
    cu = np.repeat(np.array([h * w for _, h, w in grid_thw], dtype=np.int64),
                   np.array([t for t, _, _ in grid_thw], dtype=np.int64)).cumsum()
    return np.concatenate(([0], cu)).astype(np.int32)


def compute_kv_tile_ranges(seg, tile_q, tile_k):
    """Per-query-tile [kv_tile_start, kv_tile_count) so only KV tiles that can
    contain a matching segment are visited (block-diagonal grid)."""
    S_pad = seg.shape[0]
    nq = S_pad // tile_q
    starts = np.zeros(nq, np.int32)
    counts = np.zeros(nq, np.int32)
    for i in range(nq):
        blk = seg[i * tile_q:(i + 1) * tile_q]
        lo, hi = int(blk.min()), int(blk.max())
        row_lo = int(np.searchsorted(seg, lo, side="left"))
        row_hi = int(np.searchsorted(seg, hi, side="right"))
        t0 = row_lo // tile_k
        t1 = -(-row_hi // tile_k)
        starts[i] = t0
        counts[i] = t1 - t0
    return starts, counts, int(counts.max())


# ------------------------------- parameters ---------------------------------
def init_reference_params(cfg, key):
    """Plain f32, (in, out)-layout, un-permuted weights (checkpoint layout)."""
    D = cfg.hidden_size
    I = cfg.intermediate_size
    patch_in = cfg.in_channels * cfg.temporal_patch_size * cfg.patch_size ** 2
    M = D * cfg.spatial_merge_size ** 2
    O = cfg.out_hidden_size
    keys = iter(jax.random.split(key, 8 + cfg.depth * 12))

    def w(shape, scale=0.02):
        return scale * jax.random.normal(next(keys), shape, dtype=jnp.float32)

    p = {"patch_embed_w": w((patch_in, D)),
         "ln_q_w": 1.0 + w((D,)),
         "fc1_w": w((M, M)), "fc1_b": w((M,)),
         "fc2_w": w((M, O)), "fc2_b": w((O,)),
         "blocks": []}
    for _ in range(cfg.depth):
        p["blocks"].append({
            "norm1_w": 1.0 + w((D,)), "norm2_w": 1.0 + w((D,)),
            "qkv_w": w((D, 3 * D)), "qkv_b": w((3 * D,)),
            "proj_w": w((D, D)), "proj_b": w((D,)),
            "gate_w": w((D, I)), "gate_b": w((I,)),
            "up_w": w((D, I)), "up_b": w((I,)),
            "down_w": w((I, D)), "down_b": w((D,)),
        })
    return p


def to_kernel_params(ref, cfg):
    """Kernel layout: bf16 matmul weights, (1, X) f32 biases/norms, and QKV
    q/k columns permuted to [all heads x1 | all heads x2] so RoPE is slab-wide."""
    D = cfg.hidden_size
    H = cfg.num_heads
    Dh = D // H
    hd2 = Dh // 2
    perm = np.concatenate(
        [np.arange(h * Dh, h * Dh + hd2) for h in range(H)]
        + [np.arange(h * Dh + hd2, (h + 1) * Dh) for h in range(H)]).astype(np.int32)
    qkv_perm = np.concatenate([perm, D + perm, 2 * D + np.arange(D)]).astype(np.int32)

    kp = {"patch_embed_w": ref["patch_embed_w"].astype(jnp.bfloat16),
          "ln_q_w": ref["ln_q_w"].reshape(1, D),
          "fc1_w": ref["fc1_w"].astype(jnp.bfloat16),
          "fc1_b": ref["fc1_b"].reshape(1, -1),
          "fc2_w": ref["fc2_w"].astype(jnp.bfloat16),
          "fc2_b": ref["fc2_b"].reshape(1, -1),
          "blocks": []}
    for bp in ref["blocks"]:
        kp["blocks"].append({
            "norm1_w": bp["norm1_w"].reshape(1, D),
            "norm2_w": bp["norm2_w"].reshape(1, D),
            "qkv_w": bp["qkv_w"][:, qkv_perm].astype(jnp.bfloat16),
            "qkv_b": bp["qkv_b"][qkv_perm].reshape(1, -1),
            "proj_w": bp["proj_w"].astype(jnp.bfloat16),
            "proj_b": bp["proj_b"].reshape(1, -1),
            "gate_w": bp["gate_w"].astype(jnp.bfloat16),
            "gate_b": bp["gate_b"].reshape(1, -1),
            "up_w": bp["up_w"].astype(jnp.bfloat16),
            "up_b": bp["up_b"].reshape(1, -1),
            "down_w": bp["down_w"].astype(jnp.bfloat16),
            "down_b": bp["down_b"].reshape(1, -1),
        })
    return kp


# --------------------------------- forward ----------------------------------
def qwen25_vision_forward(pixel_values, grid_thw, kparams, cfg):
    sms = cfg.spatial_merge_size
    smu = sms * sms
    D = cfg.hidden_size
    H = cfg.num_heads
    TILE = _ROW_TILE

    flat = cfg.in_channels * cfg.temporal_patch_size * cfg.patch_size ** 2
    x = pixel_values.reshape(-1, flat).astype(jnp.bfloat16)   # halve patch DMA
    S = x.shape[0]
    assert S % smu == 0
    S_pad = -(-S // TILE) * TILE                               # pad, never grid=(1,)
    if S_pad != S:
        x = jnp.pad(x, ((0, S_pad - S), (0, 0)))

    # --- patch embedding (Conv3d stride==kernel -> matmul, bias=False) ---
    hidden = pallas_patch_embed(x, kparams["patch_embed_w"], TILE)

    # --- host-side rotary / window-index / segment bookkeeping ---
    rotary = build_rotary(grid_thw, cfg, S)                    # (S, Dh//2)
    window_index, cu_window_seqlens = get_window_index(grid_thw, cfg)
    cu_window_seqlens = unique_consecutive(cu_window_seqlens)
    cu_seqlens = full_cu_seqlens(grid_thw)

    # --- reorder into window order (pad groups stay in place at the tail) ---
    # TODO(synk): fold these gathers into a scalar-prefetched Element index_map.
    widx_full = np.concatenate(
        [window_index, np.arange(S // smu, S_pad // smu)]).astype(np.int32)
    hidden = hidden.reshape(S_pad // smu, smu, D)[
        jnp.asarray(widx_full)].reshape(S_pad, D)

    rotary = rotary.reshape(S // smu, smu, -1)[window_index].reshape(S, -1)
    cos_half = np.tile(np.cos(rotary), (1, H)).astype(np.float32)   # (S, D//2)
    sin_half = np.tile(np.sin(rotary), (1, H)).astype(np.float32)
    if S_pad != S:
        pad = np.zeros((S_pad - S, D // 2), np.float32)
        cos_half = np.concatenate([cos_half, pad], axis=0)
        sin_half = np.concatenate([sin_half, pad], axis=0)
    cos_j = jnp.asarray(cos_half)
    sin_j = jnp.asarray(sin_half)

    seg_full = seg_ids_from_cu(cu_seqlens, S)
    seg_win = seg_ids_from_cu(cu_window_seqlens, S)
    if S_pad != S:
        seg_full = np.concatenate(
            [seg_full, np.full(S_pad - S, seg_full.max() + 1, np.int32)])
        seg_win = np.concatenate(
            [seg_win, np.full(S_pad - S, seg_win.max() + 1, np.int32)])

    attn_meta = {}
    for name, seg in (("full", seg_full), ("win", seg_win)):
        st, cnt, mx = compute_kv_tile_ranges(seg, TILE, TILE)
        attn_meta[name] = dict(
            seg_q=jnp.asarray(seg.reshape(S_pad, 1)),
            seg_k=jnp.asarray(seg.reshape(1, S_pad)),
            kv_start=jnp.asarray(st), kv_count=jnp.asarray(cnt), max_kv=mx)

    # --- transformer blocks: 3 fused pallas_calls per block ---
    for layer_num, bp in enumerate(kparams["blocks"]):
        meta = (attn_meta["full"] if layer_num in cfg.fullatt_block_indexes
                else attn_meta["win"])
        q, kv = pallas_qkv_rope(hidden, bp["norm1_w"], bp["qkv_w"], bp["qkv_b"],
                                cos_j, sin_j, TILE)
        hidden = pallas_flash_attn_proj(
            q, kv, hidden, meta["seg_q"], meta["seg_k"],
            bp["proj_w"], bp["proj_b"],
            meta["kv_start"], meta["kv_count"], meta["max_kv"], H, TILE, TILE)
        hidden = pallas_mlp_block(hidden, bp["norm2_w"],
                                  bp["gate_w"], bp["gate_b"],
                                  bp["up_w"], bp["up_b"],
                                  bp["down_w"], bp["down_b"], TILE)

    # --- patch merger (ln_q + fc1 + gelu + fc2, fused) ---
    merged = hidden.reshape(S_pad // smu, smu * D)      # free row-major view
    out = pallas_merger(merged, kparams["ln_q_w"],
                        kparams["fc1_w"], kparams["fc1_b"],
                        kparams["fc2_w"], kparams["fc2_b"], D)

    # --- undo window permutation (also drops padded merged rows) ---
    # TODO(synk): fold into the merger out_spec index map via scalar prefetch.
    reverse_indices = jnp.asarray(np.argsort(window_index), dtype=jnp.int32)
    return out[reverse_indices, :]


# ------------------------ pure-JAX reference forward ------------------------
def reference_forward(pixel_values, grid_thw, ref_params, cfg):
    """Un-permuted, un-tiled reference (bf16 matmul inputs to match kernel)."""
    sms = cfg.spatial_merge_size
    smu = sms * sms
    D = cfg.hidden_size
    H = cfg.num_heads
    Dh = D // H

    flat = cfg.in_channels * cfg.temporal_patch_size * cfg.patch_size ** 2
    x = pixel_values.reshape(-1, flat).astype(jnp.bfloat16)
    S = x.shape[0]
    hidden = jnp.dot(x, ref_params["patch_embed_w"].astype(jnp.bfloat16),
                     preferred_element_type=jnp.float32)

    rotary = build_rotary(grid_thw, cfg, S)
    window_index, cu_window_seqlens = get_window_index(grid_thw, cfg)
    cu_window_seqlens = unique_consecutive(cu_window_seqlens)
    cu_seqlens = full_cu_seqlens(grid_thw)

    hidden = hidden.reshape(S // smu, smu, D)[
        jnp.asarray(window_index)].reshape(S, D)
    rotary = rotary.reshape(S // smu, smu, -1)[window_index].reshape(S, -1)
    cos = jnp.asarray(np.concatenate([np.cos(rotary), np.cos(rotary)], -1)
                      .astype(np.float32))[:, None, :]          # (S,1,Dh)
    sin = jnp.asarray(np.concatenate([np.sin(rotary), np.sin(rotary)], -1)
                      .astype(np.float32))[:, None, :]

    seg_full = jnp.asarray(seg_ids_from_cu(cu_seqlens, S))
    seg_win = jnp.asarray(seg_ids_from_cu(cu_window_seqlens, S))

    def rms(x, w):
        var = jnp.mean(x * x, axis=-1, keepdims=True)
        return x * jax.lax.rsqrt(var + _EPS) * w

    def rot_half(t):
        half = t.shape[-1] // 2
        return jnp.concatenate([-t[..., half:], t[..., :half]], axis=-1)

    scale = 1.0 / float(np.sqrt(Dh))
    for layer_num, bp in enumerate(ref_params["blocks"]):
        seg = seg_full if layer_num in cfg.fullatt_block_indexes else seg_win
        mask = seg[:, None] == seg[None, :]
        xn = rms(hidden, bp["norm1_w"]).astype(jnp.bfloat16)
        qkv = jnp.dot(xn, bp["qkv_w"].astype(jnp.bfloat16),
                      preferred_element_type=jnp.float32) + bp["qkv_b"]
        q = qkv[:, :D].reshape(S, H, Dh)
        k = qkv[:, D:2 * D].reshape(S, H, Dh)
        v = qkv[:, 2 * D:].reshape(S, H, Dh)
        q = q * cos + rot_half(q) * sin
        k = k * cos + rot_half(k) * sin
        s = jnp.einsum("qhd,khd->hqk", q.astype(jnp.bfloat16),
                       k.astype(jnp.bfloat16),
                       preferred_element_type=jnp.float32) * scale
        s = jnp.where(mask[None], s, jnp.float32(-1e30))
        s = s - jnp.max(s, axis=-1, keepdims=True)
        p = jnp.exp(s)
        p = p / jnp.sum(p, axis=-1, keepdims=True)
        attn = jnp.einsum("hqk,khd->qhd", p.astype(jnp.bfloat16),
                          v.astype(jnp.bfloat16),
                          preferred_element_type=jnp.float32).reshape(S, D)
        proj = jnp.dot(attn.astype(jnp.bfloat16),
                       bp["proj_w"].astype(jnp.bfloat16),
                       preferred_element_type=jnp.float32) + bp["proj_b"]
        hidden = hidden + proj
        xn2 = rms(hidden, bp["norm2_w"]).astype(jnp.bfloat16)
        g = jnp.dot(xn2, bp["gate_w"].astype(jnp.bfloat16),
                    preferred_element_type=jnp.float32) + bp["gate_b"]
        u = jnp.dot(xn2, bp["up_w"].astype(jnp.bfloat16),
                    preferred_element_type=jnp.float32) + bp["up_b"]
        a = (jax.nn.silu(g) * u).astype(jnp.bfloat16)
        d = jnp.dot(a, bp["down_w"].astype(jnp.bfloat16),
                    preferred_element_type=jnp.float32) + bp["down_b"]
        hidden = hidden + d

    hn = rms(hidden, ref_params["ln_q_w"])
    hm = hn.reshape(S // smu, smu * D).astype(jnp.bfloat16)
    h1 = jnp.dot(hm, ref_params["fc1_w"].astype(jnp.bfloat16),
                 preferred_element_type=jnp.float32) + ref_params["fc1_b"]
    h1 = jax.nn.gelu(h1, approximate=False)
    out = jnp.dot(h1.astype(jnp.bfloat16),
                  ref_params["fc2_w"].astype(jnp.bfloat16),
                  preferred_element_type=jnp.float32) + ref_params["fc2_b"]
    rev = jnp.asarray(np.argsort(window_index), dtype=jnp.int32)
    return out[rev, :]


# ----------------------------------- main ------------------------------------
if __name__ == "__main__":
    cfg = Cfg()
    key = jax.random.PRNGKey(0)
    pkey, xkey = jax.random.split(key)
    ref_params = init_reference_params(cfg, pkey)
    kparams = to_kernel_params(ref_params, cfg)

    grid_thw = [(1, 16, 16)]                     # single image: 1x16x16 patches
    S = sum(t * h * w for t, h, w in grid_thw)   # 256 patch tokens
    flat = (cfg.in_channels * cfg.temporal_patch_size * cfg.patch_size ** 2)
    pixel_values = jax.random.normal(xkey, (S, flat), dtype=jnp.float32)

    out = qwen25_vision_forward(pixel_values, grid_thw, kparams, cfg)
    out = jax.block_until_ready(out)

    expected = (S // (cfg.spatial_merge_size ** 2), cfg.out_hidden_size)
    assert out.shape == expected, (out.shape, expected)
    assert bool(jnp.all(jnp.isfinite(out)))

    # tolerance-asserted pure-JAX reference (un-permuted weights, direct softmax)
    ref = jax.block_until_ready(
        reference_forward(pixel_values, grid_thw, ref_params, cfg))
    max_err = float(jnp.max(jnp.abs(out - ref)))
    assert max_err < 5e-2, f"kernel vs reference max |diff| = {max_err}"

    print("KERNEL_OK")
</pallas_src>

<mosaic_0001>
module attributes {stable_mosaic.version = 11 : i64} {
  func.func @kernel(%arg0: i32, %arg1: memref<128x96xbf16, #tpu.memory_space<vmem>>, %arg2: memref<96x128xbf16, #tpu.memory_space<vmem>>, %arg3: memref<128x128xf32, #tpu.memory_space<vmem>>) attributes {dimension_semantics = [#tpu.dimension_semantics<parallel>], iteration_bounds = array<i64: 2>, scalar_prefetch = 0 : i64, scratch_operands = 0 : i64, tpu.core_type = #tpu.core_type<tc>, window_params = [{transform_indices = @transform_0, window_bounds = array<i64: 128, 96>}, {pipeline_mode = #tpu.pipeline_mode<synchronous>, transform_indices = @transform_1, window_bounds = array<i64: 96, 128>}, {transform_indices = @transform_2, window_bounds = array<i64: 128, 128>}]} {
    %c0 = arith.constant 0 : index
    %c0_0 = arith.constant 0 : index
    %0 = vector.load %arg1[%c0, %c0_0] : memref<128x96xbf16, #tpu.memory_space<vmem>>, vector<128x96xbf16>
    %c0_1 = arith.constant 0 : index
    %c0_2 = arith.constant 0 : index
    %1 = vector.load %arg2[%c0_1, %c0_2] : memref<96x128xbf16, #tpu.memory_space<vmem>>, vector<96x128xbf16>
    %cst = arith.constant dense<0.000000e+00> : vector<128x128xf32>
    %2 = tpu.matmul %0, %1, %cst {dimension_numbers = #tpu.dot_dimension_numbers<[1], [0], [0], [1], [0, 0, 1, 1], [], []>} : vector<128x96xbf16>, vector<96x128xbf16>, vector<128x128xf32> -> vector<128x128xf32>
    %c0_3 = arith.constant 0 : index
    %c0_4 = arith.constant 0 : index
    %3 = vector.load %arg3[%c0_3, %c0_4] : memref<128x128xf32, #tpu.memory_space<vmem>>, vector<128x128xf32>
    tpu.vector_store %arg3[%c0_3, %c0_4], %2 {strides = array<i32>} : memref<128x128xf32, #tpu.memory_space<vmem>>, vector<128x128xf32>,
    return
  }
  func.func @transform_0(%arg0: i32) -> (i32, i32) {
    %c0_i32 = arith.constant 0 : i32
    %c0_i32_0 = arith.constant 0 : i32
    return %arg0, %c0_i32 : i32, i32
  }
  func.func @transform_1(%arg0: i32) -> (i32, i32) {
    %c0_i32 = arith.constant 0 : i32
    %c0_i32_0 = arith.constant 0 : i32
    %c0_i32_1 = arith.constant 0 : i32
    return %c0_i32, %c0_i32_0 : i32, i32
  }
  func.func @transform_2(%arg0: i32) -> (i32, i32) {
    %c0_i32 = arith.constant 0 : i32
    %c0_i32_0 = arith.constant 0 : i32
    return %arg0, %c0_i32 : i32, i32
  }
}

</mosaic_0001>

<llo_original>
// kernel: tpu_custom_call.1
$region0: #{tpu_custom_call.1}
  #allocation0 [shape = 'u32[]', space=smem, size = 0x4, offset = 0x4, fixed_abs, tag = 'smem constant byte address 0x4 - core index']
  #allocation1 [shape = 'u32[144,128]{1,0:T(1,128)}', space=vmem, size = 0x12000, scoped, tag = 'internal scratch']
  %s0 = inlined_call_operand.vmem [shape: bf16[256,96], index: 0, kind: input, shape index: {}]
  %s1 = inlined_call_operand.vmem [shape: bf16[96,128], index: 1, kind: input, shape index: {}]
  %s2 = inlined_call_operand.hbm [shape: f32[256,128], index: 2, kind: output, shape index: {}]
  %s3 = sld [smem:[#allocation0]]
  $region41: #{tpu_custom_call.1} parent=0
    _
  %s5 = ssub.s32 1, %s3
  %s6 = scalar_select 0, %s5, %s3
  $region1: #{tpu_custom_call.1} parent=0
    #allocation2 [shape = 'u8[131072]{0}', space=vmem, size = 0x20000, scoped, tag = 'output window, operand 0']
    #allocation3 [shape = 's32[2]{0}', space=sflag, size = 0x8, scoped, tag = 'scoped memory for tpu_custom_call.1']
    %7 = vsyncpa [#allocation3], 0
    %s8 = scalar_lea.sflag [#allocation3], 1
    %9 = vsyncpa %s8, 0
    loop: start=0, step=1, limit=4
    $region2: #{tpu_custom_call.1} parent=1 // loop_pre_header
      _
    $region3: #{tpu_custom_call.1} parent=1 // loop_header
      %s11 = sphi 0, %s15
      %p12 = scmp.ge.s32.totalorder %s11, 4
      %s21 = sphi 0, %s23
      %s24 = sphi 0, %s21
      %s25 = sphi 0, %s24
      %s41 = sphi 0, %s25
      %s45 = sphi 0, %s45
      %s47 = sphi 0, %s45
      %s48 = sphi 0, %s47
      %s62 = sphi 0, %s48
      %s68 = sphi 0, %s70
      %s71 = sphi 0, %s68
      %s72 = sphi 0, %s71
      %s88 = sphi 0, %s72
    $region4: #{tpu_custom_call.1} parent=1 // loop_header_branch
      %14 = sbr.rel (%p12) target = $region8
    $region5: #{tpu_custom_call.1} parent=1 // loop_body
      %s16 = ssub.s32 %s11, 1
      %s17 = ssub.s32 %s11, 2
      %s18 = sadd.s32 %s11, 1
      %s19 = ssub.s32 %s11, %s18
      %p20 = scmp.eq.s32.totalorder %s19, 0
      %s22 = sadd.s32 %s21, 1
      %s23 = scalar_select %p20, %s21, %s22
      %p26 = pneg %p20
      %p27 = scmp.eq.s32.totalorder %s11, 1
      %p28 = por %p26, %p27
      %p29 = scmp.ne.s32.totalorder %s21, %s24
      %p30 = scmp.eq.s32.totalorder %s11, 0
      %p31 = por %p29, %p30
      %p32 = scmp.ne.s32.totalorder %s21, %s24
      %p33 = scmp.eq.s32.totalorder %s16, 1
      %p34 = por %p32, %p33
      %p35 = scmp.ne.s32.totalorder %s24, %s25
      %p36 = scmp.eq.s32.totalorder %s16, 0
      %p37 = por %p35, %p36
      %p38 = scmp.ne.s32.totalorder %s24, %s25
      %p39 = scmp.eq.s32.totalorder %s17, 1
      %p40 = por %p38, %p39
      %p42 = scmp.ne.s32.totalorder %s25, %s41
      %p43 = scmp.eq.s32.totalorder %s17, 0
      %p44 = por %p42, %p43
      %s46 = sadd.s32 %s45, 1
      %p49 = scmp.eq.s32.totalorder %s11, 1
      %p50 = scmp.ne.s32.totalorder %s45, %s47
      %p51 = scmp.eq.s32.totalorder %s11, 0
      %p52 = por %p50, %p51
      %p53 = scmp.ne.s32.totalorder %s45, %s47
      %p54 = scmp.eq.s32.totalorder %s16, 1
      %p55 = por %p53, %p54
      %p56 = scmp.ne.s32.totalorder %s47, %s48
      %p57 = scmp.eq.s32.totalorder %s16, 0
      %p58 = por %p56, %p57
      %p59 = scmp.ne.s32.totalorder %s47, %s48
      %p60 = scmp.eq.s32.totalorder %s17, 1
      %p61 = por %p59, %p60
      %p63 = scmp.ne.s32.totalorder %s48, %s62
      %p64 = scmp.eq.s32.totalorder %s17, 0
      %p65 = por %p63, %p64
      %s66 = ssub.s32 %s11, %s18
      %p67 = scmp.eq.s32.totalorder %s66, 0
      %s69 = sadd.s32 %s68, 1
      %s70 = scalar_select %p67, %s68, %s69
      %p73 = pneg %p67
      %p74 = scmp.eq.s32.totalorder %s11, 1
      %p75 = por %p73, %p74
      %p76 = scmp.ne.s32.totalorder %s68, %s71
      %p77 = scmp.eq.s32.totalorder %s11, 0
      %p78 = por %p76, %p77
      %p79 = scmp.ne.s32.totalorder %s68, %s71
      %p80 = scmp.eq.s32.totalorder %s16, 1
      %p81 = por %p79, %p80
      %p82 = scmp.ne.s32.totalorder %s71, %s72
      %p83 = scmp.eq.s32.totalorder %s16, 0
      %p84 = por %p82, %p83
      %p85 = scmp.ne.s32.totalorder %s71, %s72
      %p86 = scmp.eq.s32.totalorder %s17, 1
      %p87 = por %p85, %p86
      %p89 = scmp.ne.s32.totalorder %s72, %s88
      %p90 = scmp.eq.s32.totalorder %s17, 0
      %p91 = por %p89, %p90
      %p92 = scmp.le.s32.totalorder 1, %s11
      %p93 = scmp.lt.s32.totalorder %s11, 3
      %p94 = pnand %p92, %p93
      %p95 = pneg %p94
      // Predicated region
      $region9: #{tpu_custom_call.1} parent=5 // pred_check
        _
      $region10: #{tpu_custom_call.1} parent=5 // pred_check_branch
        %97 = sbr.rel (%p94) target = $region12
      $region11: #{tpu_custom_call.1} parent=5 // pred_region
        %s98 = ssub.s32 %s11, 1
        // Predicated region
        $region13: #{tpu_custom_call.1} parent=11 // pred_check
          %p99 = pneg %p58
        $region14: #{tpu_custom_call.1} parent=11 // pred_check_branch
          %101 = sbr.rel (%p99) target = $region16
        $region15: #{tpu_custom_call.1} parent=11 // pred_region
          _
        $region16: #{tpu_custom_call.1} parent=11 // pred_fallthru
          _
      $region12: #{tpu_custom_call.1} parent=5 // pred_fallthru
        _
      %p102 = scmp.lt.s32.totalorder %s11, 2
      // Predicated region
      $region17: #{tpu_custom_call.1} parent=5 // pred_check
        %p103 = pneg %p102
      $region18: #{tpu_custom_call.1} parent=5 // pred_check_branch
        %105 = sbr.rel (%p103) target = $region20
      $region19: #{tpu_custom_call.1} parent=5 // pred_region
        // Predicated region
        $region21: #{tpu_custom_call.1} parent=19 // pred_check
          %p106 = pneg %p31
        $region22: #{tpu_custom_call.1} parent=19 // pred_check_branch
          %108 = sbr.rel (%p106) target = $region24
        $region23: #{tpu_custom_call.1} parent=19 // pred_region
          %s109 = smul.u32 16, %s11
          %p110 = scmp.lt.s32.totalorder %s109, 31
          %s111 = scalar_select %p110, %s109, 31
          %s112 = smul.addr %s111, 4
          %s113 = scalar_lea.vmem %s0, %s112
          %s114 = smul.u32 16, %s11
        $region24: #{tpu_custom_call.1} parent=19 // pred_fallthru
          _
      $region20: #{tpu_custom_call.1} parent=5 // pred_fallthru
        _
      %p115 = scmp.le.s32.totalorder 1, %s11
      %p116 = scmp.lt.s32.totalorder %s11, 3
      %p117 = pnand %p115, %p116
      %p118 = pneg %p117
      // Predicated region
      $region25: #{tpu_custom_call.1} parent=5 // pred_check
        _
      $region26: #{tpu_custom_call.1} parent=5 // pred_check_branch
        %120 = sbr.rel (%p117) target = $region28
      $region27: #{tpu_custom_call.1} parent=5 // pred_region
        %s121 = ssub.s32 %s11, 1
        %s122 = smul.u32 16, %s16
        %p123 = scmp.lt.s32.totalorder %s122, 31
        %s124 = scalar_select %p123, %s122, 31
        %s125 = smul.addr %s124, 4
        %s126 = scalar_lea.vmem %s0, %s125
        %p127 = pneg %p37
        %p128 = pneg %p34
        %p129 = pneg %p58
        %p130 = pneg %p55
        %p131 = pneg %p84
        %p132 = pneg %p81
        %s133 = sand.u32 %s71, 1
        %s134 = scalar_lea.sflag [#allocation3], %s133
        %s135 = sand.u32 %s71, 1
        %s136 = smul.addr %s135, 128
        %s137 = scalar_lea.vmem [#allocation2], %s136
        %s138 = smul.u32 16, %s16
        %p139 = scmp.lt.s32.totalorder %s138, 31
        %s140 = scalar_select %p139, %s138, 31
        %s141 = smul.addr %s140, 4
        %s142 = scalar_lea.vmem %s0, %s141
        %s143 = smul.u32 16, %s16
        %s144 = smul.u32 16, %s16
        %v146 = vld [vmem:[%s142] sm:$0xf]
        %v147 = vld [vmem:[%s142 + $0x4] sm:$0xf]
        %v148 = vld [vmem:[%s142 + $0x8] sm:$0xf]
        %v149 = vld [vmem:[%s142 + $0xc] sm:$0xf]
        %v150 = vld [vmem:[%s142 + $0x10] sm:$0xf]
        %v151 = vld [vmem:[%s142 + $0x14] sm:$0xf]
        %v152 = vld [vmem:[%s142 + $0x18] sm:$0xf]
        %v153 = vld [vmem:[%s142 + $0x1c] sm:$0xf]
        %v154 = vld [vmem:[%s142 + $0x20] sm:$0xf]
        %v155 = vld [vmem:[%s142 + $0x24] sm:$0xf]
        %v156 = vld [vmem:[%s142 + $0x28] sm:$0xf]
        %v157 = vld [vmem:[%s142 + $0x2c] sm:$0xf]
        %v158 = vld [vmem:[%s142 + $0x30] sm:$0xf]
        %v159 = vld [vmem:[%s142 + $0x34] sm:$0xf]
        %v160 = vld [vmem:[%s142 + $0x38] sm:$0xf]
        %v161 = vld [vmem:[%s142 + $0x3c] sm:$0xf]
        %v162 = vld [vmem:[%s1] sm:$0xf]
        %v163 = vld [vmem:[%s1 + $0x4] sm:$0xf]
        %v164 = vld [vmem:[%s1 + $0x8] sm:$0xf]
        %v165 = vld [vmem:[%s1 + $0xc] sm:$0xf]
        %v166 = vld [vmem:[%s1 + $0x10] sm:$0xf]
        %v167 = vld [vmem:[%s1 + $0x14] sm:$0xf]
        %v168 = vld [vmem:[%s1 + $0x18] sm:$0xf]
        %v169 = vld [vmem:[%s1 + $0x1c] sm:$0xf]
        %v170 = vld [vmem:[%s1 + $0x20] sm:$0xf]
        %v171 = vld [vmem:[%s1 + $0x24] sm:$0xf]
        %v172 = vld [vmem:[%s1 + $0x28] sm:$0xf]
        %v173 = vld [vmem:[%s1 + $0x2c] sm:$0xf]
        %v190 = vunpack.c.l.b16 %v146
        %v191 = vunpack.c.l.b16 %v147
        %v192 = vunpack.c.l.b16 %v148
        %v193 = vunpack.c.l.b16 %v149
        %v194 = vunpack.c.l.b16 %v150
        %v195 = vunpack.c.l.b16 %v151
        %v196 = vunpack.c.l.b16 %v152
        %v197 = vunpack.c.l.b16 %v153
        %v198 = vunpack.c.l.b16 %v154
        %v199 = vunpack.c.l.b16 %v155
        %v200 = vunpack.c.l.b16 %v156
        %v201 = vunpack.c.l.b16 %v157
        %v202 = vunpack.c.l.b16 %v158
        %v203 = vunpack.c.l.b16 %v159
        %v204 = vunpack.c.l.b16 %v160
        %v205 = vunpack.c.l.b16 %v161
        %v206 = vpack.c.b16 %v191, %v190
        %v207 = vpack.c.b16 %v193, %v192
        %v208 = vpack.c.b16 %v195, %v194
        %v209 = vpack.c.b16 %v197, %v196
        %v210 = vpack.c.b16 %v199, %v198
        %v211 = vpack.c.b16 %v201, %v200
        %v212 = vpack.c.b16 %v203, %v202
        %v213 = vpack.c.b16 %v205, %v204
        %v226 = vunpack.c.l.b16 %v162
        %v227 = vunpack.c.l.b16 %v163
        %v228 = vunpack.c.l.b16 %v164
        %v229 = vunpack.c.l.b16 %v165
        %v230 = vunpack.c.l.b16 %v166
        %v231 = vunpack.c.l.b16 %v167
        %v232 = vunpack.c.l.b16 %v168
        %v233 = vunpack.c.l.b16 %v169
        %v234 = vunpack.c.l.b16 %v170
        %v235 = vunpack.c.l.b16 %v171
        %v236 = vunpack.c.l.b16 %v172
        %v237 = vunpack.c.l.b16 %v173
        %v238 = vpack.c.b16 %v227, %v226
        %v239 = vpack.c.b16 %v229, %v228
        %v240 = vpack.c.b16 %v231, %v230
        %v241 = vpack.c.b16 %v233, %v232
        %v242 = vpack.c.b16 %v235, %v234
        %v243 = vpack.c.b16 %v237, %v236
        %vm250 = vcmask 785408
        %v252 = vsel %vm250, %v206, 0
        %v255 = vsel %vm250, %v207, 0
        %v258 = vsel %vm250, %v208, 0
        %v261 = vsel %vm250, %v209, 0
        %v264 = vsel %vm250, %v210, 0
        %v267 = vsel %vm250, %v211, 0
        %v270 = vsel %vm250, %v212, 0
        %v273 = vsel %vm250, %v213, 0
        %275 = vmatprep.subr.bf16.mxu0 0
        %276 = vmatpush1.bf16.msra.mxu0 0
        %277 = vmatprep.subr.bf16.mxu0 0
        %278 = vmatpush1.bf16.msra.mxu0 0
        %279 = vmatprep.subr.bf16.mxu0 0
        %280 = vmatpush1.bf16.msra.mxu0 %v243
        %281 = vmatprep.subr.bf16.mxu0 0
        %282 = vmatpush1.bf16.msra.mxu0 %v242
        %283 = vmatprep.subr.bf16.mxu0 0
        %284 = vmatpush1.bf16.msra.mxu0 %v241
        %285 = vmatprep.subr.bf16.mxu0 0
        %286 = vmatpush1.bf16.msra.mxu0 %v240
        %287 = vmatprep.subr.bf16.mxu0 0
        %288 = vmatpush1.bf16.msra.mxu0 %v239
        %289 = vmatprep.subr.bf16.mxu0 0
        %290 = vmatpush1.bf16.msra.mxu0 %v238
        %291 = vmatprep.subr.bf16.mxu0 0
        %292 = vmatpush2.bf16.msra.mxu0 0
        %293 = vmatprep.subr.bf16.mxu0 0
        %294 = vmatpush2.bf16.msra.mxu0 0
        %295 = vmatprep.subr.bf16.mxu0 0
        %296 = vmatpush2.bf16.msra.mxu0 0
        %297 = vmatprep.subr.bf16.mxu0 0
        %298 = vmatpush2.bf16.msra.mxu0 0
        %299 = vmatprep.subr.bf16.mxu0 0
        %300 = vmatpush2.bf16.msra.mxu0 0
        %301 = vmatprep.subr.bf16.mxu0 0
        %302 = vmatpush2.bf16.msra.mxu0 0
        %303 = vmatprep.subr.bf16.mxu0 0
        %304 = vmatpush2.bf16.msra.mxu0 0
        %305 = vmatprep.subr.bf16.mxu0 0
        %306 = vmatpush2.bf16.msra.mxu0 0
        %307 = vmatprep.mubr.bf16.mxu0 0
        %308 = vmatmul.mubr.bf16.gmra.mxu0 %v252
        %v309 = vpop.f32.mrf.mxu0
        %v310 = vadd.f32 0.0, %v309
        %v311 = vpop.f32.mrf.mxu0
        %v312 = vpop.f32.mrf.mxu0
        %v313 = vadd.f32 0.0, %v312
        %v314 = vpop.f32.mrf.mxu0
        %315 = vmatprep.mubr.bf16.mxu0 0
        %316 = vmatmul.mubr.bf16.gmra.mxu0 %v255
        %v317 = vpop.f32.mrf.mxu0
        %v318 = vadd.f32 0.0, %v317
        %v319 = vpop.f32.mrf.mxu0
        %v320 = vpop.f32.mrf.mxu0
        %v321 = vadd.f32 0.0, %v320
        %v322 = vpop.f32.mrf.mxu0
        %323 = vmatprep.mubr.bf16.mxu0 0
        %324 = vmatmul.mubr.bf16.gmra.mxu0 %v258
        %v325 = vpop.f32.mrf.mxu0
        %v326 = vadd.f32 0.0, %v325
        %v327 = vpop.f32.mrf.mxu0
        %v328 = vpop.f32.mrf.mxu0
        %v329 = vadd.f32 0.0, %v328
        %v330 = vpop.f32.mrf.mxu0
        %331 = vmatprep.mubr.bf16.mxu0 0
        %332 = vmatmul.mubr.bf16.gmra.mxu0 %v261
        %v333 = vpop.f32.mrf.mxu0
        %v334 = vadd.f32 0.0, %v333
        %v335 = vpop.f32.mrf.mxu0
        %v336 = vpop.f32.mrf.mxu0
        %v337 = vadd.f32 0.0, %v336
        %v338 = vpop.f32.mrf.mxu0
        %339 = vmatprep.mubr.bf16.mxu0 0
        %340 = vmatmul.mubr.bf16.gmra.mxu0 %v264
        %v341 = vpop.f32.mrf.mxu0
        %v342 = vadd.f32 0.0, %v341
        %v343 = vpop.f32.mrf.mxu0
        %v344 = vpop.f32.mrf.mxu0
        %v345 = vadd.f32 0.0, %v344
        %v346 = vpop.f32.mrf.mxu0
        %347 = vmatprep.mubr.bf16.mxu0 0
        %348 = vmatmul.mubr.bf16.gmra.mxu0 %v267
        %v349 = vpop.f32.mrf.mxu0
        %v350 = vadd.f32 0.0, %v349
        %v351 = vpop.f32.mrf.mxu0
        %v352 = vpop.f32.mrf.mxu0
        %v353 = vadd.f32 0.0, %v352
        %v354 = vpop.f32.mrf.mxu0
        %355 = vmatprep.mubr.bf16.mxu0 0
        %356 = vmatmul.mubr.bf16.gmra.mxu0 %v270
        %v357 = vpop.f32.mrf.mxu0
        %v358 = vadd.f32 0.0, %v357
        %v359 = vpop.f32.mrf.mxu0
        %v360 = vpop.f32.mrf.mxu0
        %v361 = vadd.f32 0.0, %v360
        %v362 = vpop.f32.mrf.mxu0
        %363 = vmatprep.mubr.bf16.mxu0 0
        %364 = vmatmul.mubr.bf16.gmra.mxu0 %v273
        %v365 = vpop.f32.mrf.mxu0
        %v366 = vadd.f32 0.0, %v365
        %v367 = vpop.f32.mrf.mxu0
        %v368 = vpop.f32.mrf.mxu0
        %v369 = vadd.f32 0.0, %v368
        %v370 = vpop.f32.mrf.mxu0
        %371 = vdwg.mxu0
        %372 = vst [vmem:[%s137] sm:$0xff] %v310
        %373 = vst [vmem:[%s137 + $0x8] sm:$0xff] %v313
        %374 = vst [vmem:[%s137 + $0x10] sm:$0xff] %v318
        %375 = vst [vmem:[%s137 + $0x18] sm:$0xff] %v321
        %376 = vst [vmem:[%s137 + $0x20] sm:$0xff] %v326
        %377 = vst [vmem:[%s137 + $0x28] sm:$0xff] %v329
        %378 = vst [vmem:[%s137 + $0x30] sm:$0xff] %v334
        %379 = vst [vmem:[%s137 + $0x38] sm:$0xff] %v337
        %380 = vst [vmem:[%s137 + $0x40] sm:$0xff] %v342
        %381 = vst [vmem:[%s137 + $0x48] sm:$0xff] %v345
        %382 = vst [vmem:[%s137 + $0x50] sm:$0xff] %v350
        %383 = vst [vmem:[%s137 + $0x58] sm:$0xff] %v353
        %384 = vst [vmem:[%s137 + $0x60] sm:$0xff] %v358
        %385 = vst [vmem:[%s137 + $0x68] sm:$0xff] %v361
        %386 = vst [vmem:[%s137 + $0x70] sm:$0xff] %v366
        %387 = vst [vmem:[%s137 + $0x78] sm:$0xff] %v369
        %s388 = sand.u32 %s71, 1
        %s389 = scalar_lea.sflag [#allocation3], %s388
        %s390 = sand.u32 %s71, 1
        %s391 = smul.addr %s390, 128
        %s392 = scalar_lea.vmem [#allocation2], %s391
        // Predicated region
        $region29: #{tpu_custom_call.1} parent=27 // pred_check
          %p393 = pneg %p81
        $region30: #{tpu_custom_call.1} parent=27 // pred_check_branch
          %395 = sbr.rel (%p393) target = $region32
        $region31: #{tpu_custom_call.1} parent=27 // pred_region
          %s396 = smul.u32 16, %s16
          %s398 = ssub.s32 2048, 2048
          %399 = vsyncadd %s389, %s398
          %s400 = smul.addr %s396, 128
          %s401 = scalar_lea.hbm %s2, %s400
          %s402 = sshll.u32 %s392, 4
          %s403 = int_to_ptr.vmem [resolvable:$true] %s402
          %408 = dma.vmem_to_hbm [thread:$0]  %s403, 2048, %s401, %s389, 128, 128, 8
        $region32: #{tpu_custom_call.1} parent=27 // pred_fallthru
          _
      $region28: #{tpu_custom_call.1} parent=5 // pred_fallthru
        _
      %p409 = scmp.le.s32.totalorder 2, %s11
      // Predicated region
      $region33: #{tpu_custom_call.1} parent=5 // pred_check
        %p410 = pneg %p409
      $region34: #{tpu_custom_call.1} parent=5 // pred_check_branch
        %412 = sbr.rel (%p410) target = $region36
      $region35: #{tpu_custom_call.1} parent=5 // pred_region
        %s413 = ssub.s32 %s11, 2
        // Predicated region
        $region37: #{tpu_custom_call.1} parent=35 // pred_check
          %p414 = pneg %p87
        $region38: #{tpu_custom_call.1} parent=35 // pred_check_branch
          %416 = sbr.rel (%p414) target = $region40
        $region39: #{tpu_custom_call.1} parent=35 // pred_region
          %s417 = sand.u32 %s72, 1
          %s418 = scalar_lea.sflag [#allocation3], %s417
          %s419 = sand.u32 %s72, 1
          %s420 = smul.addr %s419, 128
          %s421 = scalar_lea.vmem [#allocation2], %s420
          %422 = dma.done %s418, 2048
        $region40: #{tpu_custom_call.1} parent=35 // pred_fallthru
          _
      $region36: #{tpu_custom_call.1} parent=5 // pred_fallthru
        _
    $region6: #{tpu_custom_call.1} parent=1 // loop_footer
      %s15 = sadd.s32 1, %s11
    $region7: #{tpu_custom_call.1} parent=1 // loop_footer_branch
      %10 = sbr.rel target = $region3
    $region8: #{tpu_custom_call.1} parent=1 // loop_exit
      _
    %423 = vsyncpa [#allocation3], 1
    %s424 = scalar_lea.sflag [#allocation3], 1
    %425 = vsyncpa %s424, 1

</llo_original>
